<compile_context>
chip_gen: v7x
topology: tpu7x:2x2x1
jax: 0.10.0
libtpu: 0.0.40
codegen_flags: <defaults>
</compile_context>

<pallas_src>
import jax
import jax.numpy as jnp
from jax.experimental import pallas as pl
from jax.experimental.pallas import tpu as pltpu

D = 20                 # feature dim of ChildNet's parameter w
_LANE = 128            # TPU lane width; batch tiles are multiples of this
_DEFAULT_TB = 16384    # batch rows per tile (see VMEM budget in header)
_MIN_GRID_STEPS = 4    # keep >= 2x TensorCores worth of grid steps (v7x)
_PALLAS_MIN_B = 1024   # below this, XLA's fused matvec wins
_VMEM_LIMIT = 32 * 1024 * 1024


def _matvec_kernel(x_ref, w_ref, out_ref):
    # x_ref:   [TB, D]  batch-major input tile (exactly the HBM layout; no
    #                   wrapper transpose).  Last tile may be clipped.
    # w_ref:   [D] as [1, D] weight row (resident across grid steps).
    # out_ref: [1, TB]  lane-dense output slab (no masked column stores).
    prod = x_ref[...] * w_ref[...]          # VPU; w broadcast over sublanes
    s = jnp.sum(prod, axis=1)               # per-row reduce over the 20 lanes (XLU)
    out_ref[...] = s[None, :]               # relayout to lane-dense row; hidden under DMA
    # TODO(synk): optional micro-opt from review — pass w as 20 SMEM scalars and
    # unroll 20 vector-scalar MACs if a bundle dump ever shows VALU/XLU exposed.


def childnet_forward(inputs, w, *, block_b=None, use_pallas=None):
    """Pallas equivalent of ChildNet.forward.

    inputs: [B, D] float32
    w:      [D]    float32
    returns (outs [B], w [D])
    """
    B, Din = inputs.shape
    assert Din == w.shape[0]

    if use_pallas is None:
        use_pallas = B >= _PALLAS_MIN_B
    if not use_pallas:
        # Tiny-batch fast path: launch overhead >> a few KB of HBM traffic.
        return inputs @ w, w

    if block_b is not None:
        tb = block_b
    else:
        # Cap the tile so the grid has >= _MIN_GRID_STEPS steps (keeps both
        # v7x TensorCores fed and gives the BlockSpec pipeline room to
        # double-buffer), never below one lane width.
        cap = pl.cdiv(pl.cdiv(B, _MIN_GRID_STEPS), _LANE) * _LANE
        tb = max(_LANE, min(_DEFAULT_TB, cap))
    assert tb % _LANE == 0, "block_b must be a multiple of 128"

    grid = (pl.cdiv(B, tb),)                 # partial last block is clipped
    w_row = w.reshape(1, Din)                # 80 bytes; negligible

    out_row = pl.pallas_call(
        _matvec_kernel,
        out_shape=jax.ShapeDtypeStruct((1, B), jnp.float32),
        grid_spec=pltpu.PrefetchScalarGridSpec(
            num_scalar_prefetch=0,
            grid=grid,
            in_specs=[
                # Batch-tiled rows, straight from HBM (last dim == full D=20).
                # TODO(synk): sweep pipeline_mode=pl.Buffered(3) here if xprof
                # still shows inter-step DMA bubbles at large B.
                pl.BlockSpec((tb, Din), lambda i: (i, 0)),
                # Weight row, constant across grid steps.
                pl.BlockSpec((1, Din), lambda i: (0, 0)),
            ],
            out_specs=pl.BlockSpec((1, tb), lambda i: (0, i)),
        ),
        compiler_params=pltpu.CompilerParams(
            dimension_semantics=("parallel",),   # shards tiles across TCs on v7x
            vmem_limit_bytes=_VMEM_LIMIT,
        ),
        # Reflects exactly what the kernel touches (no pad, no extra passes).
        cost_estimate=pl.CostEstimate(
            flops=2 * B * Din,
            transcendentals=0,
            bytes_accessed=B * Din * 4 + Din * 4 + B * 4,
        ),
    )(inputs, w_row)

    return out_row.reshape(B), w


if __name__ == "__main__":
    key = jax.random.PRNGKey(0)
    kx, kw = jax.random.split(key)

    # Small batch; non-multiple of 128 exercises the clipped-last-block path.
    B = 300
    inputs = jax.random.normal(kx, (B, D), dtype=jnp.float32)
    # ChildNet.__init__ uses torch.zeros(20); zeros make the output trivially
    # zero, so use a deterministic non-trivial init for a meaningful check.
    w = jax.random.normal(kw, (D,), dtype=jnp.float32)

    # Force the Pallas path (B < _PALLAS_MIN_B would otherwise use XLA).
    outs, w_out = childnet_forward(inputs, w, use_pallas=True)
    outs = jax.block_until_ready(outs)
    w_out = jax.block_until_ready(w_out)

    ref = inputs @ w
    assert outs.shape == (B,)
    assert w_out.shape == (D,)
    assert jnp.allclose(outs, ref, atol=1e-5, rtol=1e-5)
    assert jnp.array_equal(w_out, w)

    # Also check the tiny-batch XLA fast path used in production for B < 1024.
    outs_small, w_small = childnet_forward(inputs[:8], w)
    outs_small = jax.block_until_ready(outs_small)
    assert jnp.allclose(outs_small, inputs[:8] @ w, atol=1e-5, rtol=1e-5)
    assert jnp.array_equal(w_small, w)

    print("KERNEL_OK")
</pallas_src>

<mosaic_0001>
module attributes {stable_mosaic.version = 11 : i64} {
  func.func @_matvec_kernel(%arg0: i32, %arg1: memref<128x20xf32, #tpu.memory_space<vmem>>, %arg2: memref<1x20xf32, #tpu.memory_space<vmem>>, %arg3: memref<1x128xf32, #tpu.memory_space<vmem>>) attributes {dimension_semantics = [#tpu.dimension_semantics<parallel>], iteration_bounds = array<i64: 3>, scalar_prefetch = 0 : i64, scratch_operands = 0 : i64, tpu.core_type = #tpu.core_type<tc>, window_params = [{transform_indices = @transform_0, window_bounds = array<i64: 128, 20>}, {pipeline_mode = #tpu.pipeline_mode<synchronous>, transform_indices = @transform_1, window_bounds = array<i64: 1, 20>}, {transform_indices = @transform_2, window_bounds = array<i64: 1, 128>}]} {
    %c0 = arith.constant 0 : index
    %c0_0 = arith.constant 0 : index
    %0 = vector.load %arg1[%c0, %c0_0] : memref<128x20xf32, #tpu.memory_space<vmem>>, vector<128x20xf32>
    %c0_1 = arith.constant 0 : index
    %c0_2 = arith.constant 0 : index
    %1 = vector.load %arg2[%c0_1, %c0_2] : memref<1x20xf32, #tpu.memory_space<vmem>>, vector<1x20xf32>
    %2 = vector.broadcast %1 : vector<1x20xf32> to vector<128x20xf32>
    %3 = arith.mulf %0, %2 : vector<128x20xf32>
    %cst = arith.constant dense<0.000000e+00> : vector<128xf32>
    %4 = vector.multi_reduction <add>, %3, %cst [1] : vector<128x20xf32> to vector<128xf32>
    %5 = vector.shape_cast %4 : vector<128xf32> to vector<1x128xf32>
    %c0_3 = arith.constant 0 : index
    %c0_4 = arith.constant 0 : index
    %6 = vector.load %arg3[%c0_3, %c0_4] : memref<1x128xf32, #tpu.memory_space<vmem>>, vector<1x128xf32>
    tpu.vector_store %arg3[%c0_3, %c0_4], %5 {strides = array<i32>} : memref<1x128xf32, #tpu.memory_space<vmem>>, vector<1x128xf32>,
    return
  }
  func.func @transform_0(%arg0: i32) -> (i32, i32) {
    %c0_i32 = arith.constant 0 : i32
    %c0_i32_0 = arith.constant 0 : i32
    return %arg0, %c0_i32 : i32, i32
  }
  func.func @transform_1(%arg0: i32) -> (i32, i32) {
    %c0_i32 = arith.constant 0 : i32
    %c0_i32_0 = arith.constant 0 : i32
    %c0_i32_1 = arith.constant 0 : i32
    return %c0_i32, %c0_i32_0 : i32, i32
  }
  func.func @transform_2(%arg0: i32) -> (i32, i32) {
    %c0_i32 = arith.constant 0 : i32
    %c0_i32_0 = arith.constant 0 : i32
    return %c0_i32, %arg0 : i32, i32
  }
}

</mosaic_0001>

<llo_original>
// kernel: tpu_custom_call.1
$region0: #{tpu_custom_call.1}
  #allocation0 [shape = 'u32[]', space=smem, size = 0x4, offset = 0x4, fixed_abs, tag = 'smem constant byte address 0x4 - core index']
  #allocation1 [shape = 'u32[144,128]{1,0:T(1,128)}', space=vmem, size = 0x12000, scoped, tag = 'internal scratch']
  %s0 = inlined_call_operand.vmem [shape: f32[300,20], index: 0, kind: input, shape index: {}]
  %s1 = inlined_call_operand.vmem [shape: f32[1,20], index: 1, kind: input, shape index: {}]
  %s2 = inlined_call_operand.hbm [shape: f32[1,300], index: 2, kind: output, shape index: {}]
  %s3 = sld [smem:[#allocation0]]
  $region41: #{tpu_custom_call.1} parent=0
    _
  %s5 = ssub.s32 1, %s3
  %s6 = scalar_select 0, %s5, %s3
  $region1: #{tpu_custom_call.1} parent=0
    #allocation2 [shape = 'u8[1024]{0}', space=vmem, size = 0x400, scoped, tag = 'output window, operand 0']
    #allocation3 [shape = 's32[2]{0}', space=sflag, size = 0x8, scoped, tag = 'scoped memory for tpu_custom_call.1']
    %7 = vsyncpa [#allocation3], 0
    %s8 = scalar_lea.sflag [#allocation3], 1
    %9 = vsyncpa %s8, 0
    loop: start=0, step=1, limit=5
    $region2: #{tpu_custom_call.1} parent=1 // loop_pre_header
      _
    $region3: #{tpu_custom_call.1} parent=1 // loop_header
      %s11 = sphi 0, %s15
      %p12 = scmp.ge.s32.totalorder %s11, 5
      %s21 = sphi 0, %s23
      %s24 = sphi 0, %s21
      %s25 = sphi 0, %s24
      %s41 = sphi 0, %s25
      %s45 = sphi 0, %s45
      %s47 = sphi 0, %s45
      %s48 = sphi 0, %s47
      %s62 = sphi 0, %s48
      %s68 = sphi 0, %s70
      %s71 = sphi 0, %s68
      %s72 = sphi 0, %s71
      %s88 = sphi 0, %s72
    $region4: #{tpu_custom_call.1} parent=1 // loop_header_branch
      %14 = sbr.rel (%p12) target = $region8
    $region5: #{tpu_custom_call.1} parent=1 // loop_body
      %s16 = ssub.s32 %s11, 1
      %s17 = ssub.s32 %s11, 2
      %s18 = sadd.s32 %s11, 1
      %s19 = ssub.s32 %s11, %s18
      %p20 = scmp.eq.s32.totalorder %s19, 0
      %s22 = sadd.s32 %s21, 1
      %s23 = scalar_select %p20, %s21, %s22
      %p26 = pneg %p20
      %p27 = scmp.eq.s32.totalorder %s11, 2
      %p28 = por %p26, %p27
      %p29 = scmp.ne.s32.totalorder %s21, %s24
      %p30 = scmp.eq.s32.totalorder %s11, 0
      %p31 = por %p29, %p30
      %p32 = scmp.ne.s32.totalorder %s21, %s24
      %p33 = scmp.eq.s32.totalorder %s16, 2
      %p34 = por %p32, %p33
      %p35 = scmp.ne.s32.totalorder %s24, %s25
      %p36 = scmp.eq.s32.totalorder %s16, 0
      %p37 = por %p35, %p36
      %p38 = scmp.ne.s32.totalorder %s24, %s25
      %p39 = scmp.eq.s32.totalorder %s17, 2
      %p40 = por %p38, %p39
      %p42 = scmp.ne.s32.totalorder %s25, %s41
      %p43 = scmp.eq.s32.totalorder %s17, 0
      %p44 = por %p42, %p43
      %s46 = sadd.s32 %s45, 1
      %p49 = scmp.eq.s32.totalorder %s11, 2
      %p50 = scmp.ne.s32.totalorder %s45, %s47
      %p51 = scmp.eq.s32.totalorder %s11, 0
      %p52 = por %p50, %p51
      %p53 = scmp.ne.s32.totalorder %s45, %s47
      %p54 = scmp.eq.s32.totalorder %s16, 2
      %p55 = por %p53, %p54
      %p56 = scmp.ne.s32.totalorder %s47, %s48
      %p57 = scmp.eq.s32.totalorder %s16, 0
      %p58 = por %p56, %p57
      %p59 = scmp.ne.s32.totalorder %s47, %s48
      %p60 = scmp.eq.s32.totalorder %s17, 2
      %p61 = por %p59, %p60
      %p63 = scmp.ne.s32.totalorder %s48, %s62
      %p64 = scmp.eq.s32.totalorder %s17, 0
      %p65 = por %p63, %p64
      %s66 = ssub.s32 %s11, %s18
      %p67 = scmp.eq.s32.totalorder %s66, 0
      %s69 = sadd.s32 %s68, 1
      %s70 = scalar_select %p67, %s68, %s69
      %p73 = pneg %p67
      %p74 = scmp.eq.s32.totalorder %s11, 2
      %p75 = por %p73, %p74
      %p76 = scmp.ne.s32.totalorder %s68, %s71
      %p77 = scmp.eq.s32.totalorder %s11, 0
      %p78 = por %p76, %p77
      %p79 = scmp.ne.s32.totalorder %s68, %s71
      %p80 = scmp.eq.s32.totalorder %s16, 2
      %p81 = por %p79, %p80
      %p82 = scmp.ne.s32.totalorder %s71, %s72
      %p83 = scmp.eq.s32.totalorder %s16, 0
      %p84 = por %p82, %p83
      %p85 = scmp.ne.s32.totalorder %s71, %s72
      %p86 = scmp.eq.s32.totalorder %s17, 2
      %p87 = por %p85, %p86
      %p89 = scmp.ne.s32.totalorder %s72, %s88
      %p90 = scmp.eq.s32.totalorder %s17, 0
      %p91 = por %p89, %p90
      %p92 = scmp.le.s32.totalorder 1, %s11
      %p93 = scmp.lt.s32.totalorder %s11, 4
      %p94 = pnand %p92, %p93
      %p95 = pneg %p94
      // Predicated region
      $region9: #{tpu_custom_call.1} parent=5 // pred_check
        _
      $region10: #{tpu_custom_call.1} parent=5 // pred_check_branch
        %97 = sbr.rel (%p94) target = $region12
      $region11: #{tpu_custom_call.1} parent=5 // pred_region
        %s98 = ssub.s32 %s11, 1
        // Predicated region
        $region13: #{tpu_custom_call.1} parent=11 // pred_check
          %p99 = pneg %p58
        $region14: #{tpu_custom_call.1} parent=11 // pred_check_branch
          %101 = sbr.rel (%p99) target = $region16
        $region15: #{tpu_custom_call.1} parent=11 // pred_region
          _
        $region16: #{tpu_custom_call.1} parent=11 // pred_fallthru
          _
      $region12: #{tpu_custom_call.1} parent=5 // pred_fallthru
        _
      %p102 = scmp.lt.s32.totalorder %s11, 3
      // Predicated region
      $region17: #{tpu_custom_call.1} parent=5 // pred_check
        %p103 = pneg %p102
      $region18: #{tpu_custom_call.1} parent=5 // pred_check_branch
        %105 = sbr.rel (%p103) target = $region20
      $region19: #{tpu_custom_call.1} parent=5 // pred_region
        // Predicated region
        $region21: #{tpu_custom_call.1} parent=19 // pred_check
          %p106 = pneg %p31
        $region22: #{tpu_custom_call.1} parent=19 // pred_check_branch
          %108 = sbr.rel (%p106) target = $region24
        $region23: #{tpu_custom_call.1} parent=19 // pred_region
          %s109 = smul.u32 16, %s11
          %s110 = ssub.s32 38, %s109
          %p111 = scmp.lt.s32.totalorder %s110, 16
          %s112 = scalar_select %p111, %s110, 16
          %s113 = smul.u32 128, %s112
          %p114 = scmp.lt.s32.totalorder %s109, 37
          %s115 = scalar_select %p114, %s109, 37
          %s116 = smul.addr %s115, 8
          %s117 = scalar_lea.vmem %s0, %s116
          %s118 = smul.u32 16, %s11
          %s119 = ssub.s32 38, %s118
          %p120 = scmp.lt.s32.totalorder %s119, 16
          %s121 = scalar_select %p120, %s119, 16
          %s122 = smul.u32 128, %s121
        $region24: #{tpu_custom_call.1} parent=19 // pred_fallthru
          _
      $region20: #{tpu_custom_call.1} parent=5 // pred_fallthru
        _
      %p123 = scmp.le.s32.totalorder 1, %s11
      %p124 = scmp.lt.s32.totalorder %s11, 4
      %p125 = pnand %p123, %p124
      %p126 = pneg %p125
      // Predicated region
      $region25: #{tpu_custom_call.1} parent=5 // pred_check
        _
      $region26: #{tpu_custom_call.1} parent=5 // pred_check_branch
        %128 = sbr.rel (%p125) target = $region28
      $region27: #{tpu_custom_call.1} parent=5 // pred_region
        %s129 = ssub.s32 %s11, 1
        %s130 = smul.u32 16, %s16
        %s131 = ssub.s32 38, %s130
        %p132 = scmp.lt.s32.totalorder %s131, 16
        %s133 = scalar_select %p132, %s131, 16
        %s134 = smul.u32 128, %s133
        %p135 = scmp.lt.s32.totalorder %s130, 37
        %s136 = scalar_select %p135, %s130, 37
        %s137 = smul.addr %s136, 8
        %s138 = scalar_lea.vmem %s0, %s137
        %p139 = pneg %p37
        %p140 = pneg %p34
        %p141 = pneg %p58
        %p142 = pneg %p55
        %p143 = pneg %p84
        %p144 = pneg %p81
        %s145 = sand.u32 %s71, 1
        %s146 = scalar_lea.sflag [#allocation3], %s145
        %s147 = sand.u32 %s71, 1
        %s148 = scalar_lea.vmem [#allocation2], %s147
        %s149 = smul.u32 16, %s16
        %s150 = ssub.s32 38, %s149
        %p151 = scmp.lt.s32.totalorder %s150, 16
        %s152 = scalar_select %p151, %s150, 16
        %s153 = smul.u32 128, %s152
        %p154 = scmp.lt.s32.totalorder %s149, 37
        %s155 = scalar_select %p154, %s149, 37
        %s156 = smul.addr %s155, 8
        %s157 = scalar_lea.vmem %s0, %s156
        %s158 = smul.u32 16, %s16
        %s159 = ssub.s32 38, %s158
        %p160 = scmp.lt.s32.totalorder %s159, 16
        %s161 = scalar_select %p160, %s159, 16
        %s162 = smul.u32 128, %s161
        %v163 = vld [vmem:[%s157] sm:$0xff]
        %v164 = vld [vmem:[%s157 + $0x8] sm:$0xff]
        %v165 = vld [vmem:[%s157 + $0x10] sm:$0xff]
        %v166 = vld [vmem:[%s157 + $0x18] sm:$0xff]
        %v167 = vld [vmem:[%s157 + $0x20] sm:$0xff]
        %v168 = vld [vmem:[%s157 + $0x28] sm:$0xff]
        %v169 = vld [vmem:[%s157 + $0x30] sm:$0xff]
        %v170 = vld [vmem:[%s157 + $0x38] sm:$0xff]
        %v171 = vld [vmem:[%s157 + $0x40] sm:$0xff]
        %v172 = vld [vmem:[%s157 + $0x48] sm:$0xff]
        %v173 = vld [vmem:[%s157 + $0x50] sm:$0xff]
        %v174 = vld [vmem:[%s157 + $0x58] sm:$0xff]
        %v175 = vld [vmem:[%s157 + $0x60] sm:$0xff]
        %v176 = vld [vmem:[%s157 + $0x68] sm:$0xff]
        %v177 = vld [vmem:[%s157 + $0x70] sm:$0xff]
        %v178 = vld [vmem:[%s157 + $0x78] sm:$0xff]
        %v179 = vld [vmem:[%s1] sm:$0x1]
        %v181 = vlaneseq
        %v182 = vshrl.u32 %v181, 7
        %v183 = vsub.s32 0, %v182
        %v184 = vrot.slane %v179, %v183
        %v186 = vmul.f32 %v163, %v184
        %v187 = vmul.f32 %v164, %v184
        %v188 = vmul.f32 %v165, %v184
        %v189 = vmul.f32 %v166, %v184
        %v190 = vmul.f32 %v167, %v184
        %v191 = vmul.f32 %v168, %v184
        %v192 = vmul.f32 %v169, %v184
        %v193 = vmul.f32 %v170, %v184
        %v194 = vmul.f32 %v171, %v184
        %v195 = vmul.f32 %v172, %v184
        %v196 = vmul.f32 %v173, %v184
        %v197 = vmul.f32 %v174, %v184
        %v198 = vmul.f32 %v175, %v184
        %v199 = vmul.f32 %v176, %v184
        %v200 = vmul.f32 %v177, %v184
        %v201 = vmul.f32 %v178, %v184
        %vm202 = vcmask 162816
        %v203 = vsel %vm202, %v186, 0.0
        %204 = vadd.xlane.f32.xlu0 %v203
        %v205 = vpop.xlane.xlu0 %204
        %v206 = vsel %vm202, %v187, 0.0
        %207 = vadd.xlane.f32.xlu0 %v206
        %v208 = vpop.xlane.xlu0 %207
        %v209 = vsel %vm202, %v188, 0.0
        %210 = vadd.xlane.f32.xlu0 %v209
        %v211 = vpop.xlane.xlu0 %210
        %v212 = vsel %vm202, %v189, 0.0
        %213 = vadd.xlane.f32.xlu0 %v212
        %v214 = vpop.xlane.xlu0 %213
        %v215 = vsel %vm202, %v190, 0.0
        %216 = vadd.xlane.f32.xlu0 %v215
        %v217 = vpop.xlane.xlu0 %216
        %v218 = vsel %vm202, %v191, 0.0
        %219 = vadd.xlane.f32.xlu0 %v218
        %v220 = vpop.xlane.xlu0 %219
        %v221 = vsel %vm202, %v192, 0.0
        %222 = vadd.xlane.f32.xlu0 %v221
        %v223 = vpop.xlane.xlu0 %222
        %v224 = vsel %vm202, %v193, 0.0
        %225 = vadd.xlane.f32.xlu0 %v224
        %v226 = vpop.xlane.xlu0 %225
        %v227 = vsel %vm202, %v194, 0.0
        %228 = vadd.xlane.f32.xlu0 %v227
        %v229 = vpop.xlane.xlu0 %228
        %v230 = vsel %vm202, %v195, 0.0
        %231 = vadd.xlane.f32.xlu0 %v230
        %v232 = vpop.xlane.xlu0 %231
        %v233 = vsel %vm202, %v196, 0.0
        %234 = vadd.xlane.f32.xlu0 %v233
        %v235 = vpop.xlane.xlu0 %234
        %v236 = vsel %vm202, %v197, 0.0
        %237 = vadd.xlane.f32.xlu0 %v236
        %v238 = vpop.xlane.xlu0 %237
        %v239 = vsel %vm202, %v198, 0.0
        %240 = vadd.xlane.f32.xlu0 %v239
        %v241 = vpop.xlane.xlu0 %240
        %v242 = vsel %vm202, %v199, 0.0
        %243 = vadd.xlane.f32.xlu0 %v242
        %v244 = vpop.xlane.xlu0 %243
        %v245 = vsel %vm202, %v200, 0.0
        %246 = vadd.xlane.f32.xlu0 %v245
        %v247 = vpop.xlane.xlu0 %246
        %v248 = vsel %vm202, %v201, 0.0
        %249 = vadd.xlane.f32.xlu0 %v248
        %v250 = vpop.xlane.xlu0 %249
        %v267 = vlaneseq
        %v268 = vand.u32 %v267, 127
        %v269 = vlaneseq
        %v270 = vshrl.u32 %v269, 7
        %v271 = vsub.s32 %v268, %v270
        %v272 = vrot.slane %v205, %v271
        %v273 = vadd.s32 %v268, 4294967288
        %v274 = vlaneseq
        %v275 = vshrl.u32 %v274, 7
        %v276 = vsub.s32 %v273, %v275
        %v277 = vrot.slane %v208, %v276
        %vm278 = vcmask 130112
        %v279 = vsel %vm278, %v277, %v272
        %v280 = vadd.s32 %v268, 4294967280
        %v281 = vlaneseq
        %v282 = vshrl.u32 %v281, 7
        %v283 = vsub.s32 %v280, %v282
        %v284 = vrot.slane %v211, %v283
        %vm285 = vcmask 195712
        %v286 = vsel %vm285, %v284, %v279
        %v287 = vadd.s32 %v268, 4294967272
        %v288 = vlaneseq
        %v289 = vshrl.u32 %v288, 7
        %v290 = vsub.s32 %v287, %v289
        %v291 = vrot.slane %v214, %v290
        %vm292 = vcmask 261312
        %v293 = vsel %vm292, %v291, %v286
        %v294 = vadd.s32 %v268, 4294967264
        %v295 = vlaneseq
        %v296 = vshrl.u32 %v295, 7
        %v297 = vsub.s32 %v294, %v296
        %v298 = vrot.slane %v217, %v297
        %vm299 = vcmask 326912
        %v300 = vsel %vm299, %v298, %v293
        %v301 = vadd.s32 %v268, 4294967256
        %v302 = vlaneseq
        %v303 = vshrl.u32 %v302, 7
        %v304 = vsub.s32 %v301, %v303
        %v305 = vrot.slane %v220, %v304
        %vm306 = vcmask 392512
        %v307 = vsel %vm306, %v305, %v300
        %v308 = vadd.s32 %v268, 4294967248
        %v309 = vlaneseq
        %v310 = vshrl.u32 %v309, 7
        %v311 = vsub.s32 %v308, %v310
        %v312 = vrot.slane %v223, %v311
        %vm313 = vcmask 458112
        %v314 = vsel %vm313, %v312, %v307
        %v315 = vadd.s32 %v268, 4294967240
        %v316 = vlaneseq
        %v317 = vshrl.u32 %v316, 7
        %v318 = vsub.s32 %v315, %v317
        %v319 = vrot.slane %v226, %v318
        %vm320 = vcmask 523712
        %v321 = vsel %vm320, %v319, %v314
        %v322 = vadd.s32 %v268, 4294967232
        %v323 = vlaneseq
        %v324 = vshrl.u32 %v323, 7
        %v325 = vsub.s32 %v322, %v324
        %v326 = vrot.slane %v229, %v325
        %vm327 = vcmask 589312
        %v328 = vsel %vm327, %v326, %v321
        %v329 = vadd.s32 %v268, 4294967224
        %v330 = vlaneseq
        %v331 = vshrl.u32 %v330, 7
        %v332 = vsub.s32 %v329, %v331
        %v333 = vrot.slane %v232, %v332
        %vm334 = vcmask 654912
        %v335 = vsel %vm334, %v333, %v328
        %v336 = vadd.s32 %v268, 4294967216
        %v337 = vlaneseq
        %v338 = vshrl.u32 %v337, 7
        %v339 = vsub.s32 %v336, %v338
        %v340 = vrot.slane %v235, %v339
        %vm341 = vcmask 720512
        %v342 = vsel %vm341, %v340, %v335
        %v343 = vadd.s32 %v268, 4294967208
        %v344 = vlaneseq
        %v345 = vshrl.u32 %v344, 7
        %v346 = vsub.s32 %v343, %v345
        %v347 = vrot.slane %v238, %v346
        %vm348 = vcmask 786112
        %v349 = vsel %vm348, %v347, %v342
        %v350 = vadd.s32 %v268, 4294967200
        %v351 = vlaneseq
        %v352 = vshrl.u32 %v351, 7
        %v353 = vsub.s32 %v350, %v352
        %v354 = vrot.slane %v241, %v353
        %vm355 = vcmask 851712
        %v356 = vsel %vm355, %v354, %v349
        %v357 = vadd.s32 %v268, 4294967192
        %v358 = vlaneseq
        %v359 = vshrl.u32 %v358, 7
        %v360 = vsub.s32 %v357, %v359
        %v361 = vrot.slane %v244, %v360
        %vm362 = vcmask 917312
        %v363 = vsel %vm362, %v361, %v356
        %v364 = vadd.s32 %v268, 4294967184
        %v365 = vlaneseq
        %v366 = vshrl.u32 %v365, 7
        %v367 = vsub.s32 %v364, %v366
        %v368 = vrot.slane %v247, %v367
        %vm369 = vcmask 982912
        %v370 = vsel %vm369, %v368, %v363
        %v371 = vadd.s32 %v268, 4294967176
        %v372 = vlaneseq
        %v373 = vshrl.u32 %v372, 7
        %v374 = vsub.s32 %v371, %v373
        %v375 = vrot.slane %v250, %v374
        %vm376 = vcmask 1048512
        %v377 = vsel %vm376, %v375, %v370
        %379 = vst [vmem:[%s148] sm:$0x1] %v377
        %s380 = sand.u32 %s71, 1
        %s381 = scalar_lea.sflag [#allocation3], %s380
        %s382 = sand.u32 %s71, 1
        %s383 = scalar_lea.vmem [#allocation2], %s382
        // Predicated region
        $region29: #{tpu_custom_call.1} parent=27 // pred_check
          %p384 = pneg %p81
        $region30: #{tpu_custom_call.1} parent=27 // pred_check_branch
          %386 = sbr.rel (%p384) target = $region32
        $region31: #{tpu_custom_call.1} parent=27 // pred_region
          %s388 = ssub.s32 16, 16
          %389 = vsyncadd %s381, %s388
          %s390 = smul.addr %s16, 16
          %s391 = scalar_lea.hbm %s2, %s390
          %s393 = sshll.u32 %s383, 4
          %s394 = int_to_ptr.vmem [resolvable:$true] %s393
          %396 = dma.vmem_to_hbm [thread:$0]  %s394, 16, %s391, %s381
        $region32: #{tpu_custom_call.1} parent=27 // pred_fallthru
          _
      $region28: #{tpu_custom_call.1} parent=5 // pred_fallthru
        _
      %p397 = scmp.le.s32.totalorder 2, %s11
      // Predicated region
      $region33: #{tpu_custom_call.1} parent=5 // pred_check
        %p398 = pneg %p397
      $region34: #{tpu_custom_call.1} parent=5 // pred_check_branch
        %400 = sbr.rel (%p398) target = $region36
      $region35: #{tpu_custom_call.1} parent=5 // pred_region
        %s401 = ssub.s32 %s11, 2
        // Predicated region
        $region37: #{tpu_custom_call.1} parent=35 // pred_check
          %p402 = pneg %p87
        $region38: #{tpu_custom_call.1} parent=35 // pred_check_branch
          %404 = sbr.rel (%p402) target = $region40
        $region39: #{tpu_custom_call.1} parent=35 // pred_region
          %s405 = sand.u32 %s72, 1
          %s406 = scalar_lea.sflag [#allocation3], %s405
          %s407 = sand.u32 %s72, 1
          %s408 = scalar_lea.vmem [#allocation2], %s407
          %409 = dma.done %s406, 16
        $region40: #{tpu_custom_call.1} parent=35 // pred_fallthru
          _
      $region36: #{tpu_custom_call.1} parent=5 // pred_fallthru
        _
    $region6: #{tpu_custom_call.1} parent=1 // loop_footer
      %s15 = sadd.s32 1, %s11
    $region7: #{tpu_custom_call.1} parent=1 // loop_footer_branch
      %10 = sbr.rel target = $region3
    $region8: #{tpu_custom_call.1} parent=1 // loop_exit
      _
    %410 = vsyncpa [#allocation3], 1
    %s411 = scalar_lea.sflag [#allocation3], 1
    %412 = vsyncpa %s411, 1

</llo_original>
